<compile_context>
chip_gen: v7x
topology: tpu7x:2x2x1
jax: 0.10.0
libtpu: 0.0.40
codegen_flags: <defaults>
</compile_context>

<pallas_src>
import functools

import jax
import jax.numpy as jnp
from jax.experimental import pallas as pl
from jax.experimental.pallas import tpu as pltpu

EPS = 1e-5
_LANE_TILES = (2048, 1024, 512, 256, 128)   # candidate lane-dense L-tile widths
_SMALL_CIN_FOR_VPU = 4                      # Cin <= 4: broadcast-FMA instead of MXU


def _round_up(v, m):
    return ((v + m - 1) // m) * m


@functools.lru_cache(maxsize=1)
def _vmem_capacity_bytes():
    try:
        return int(getattr(pltpu.get_tpu_info(), "vmem_capacity_bytes", 64 << 20))
    except Exception:
        return 64 << 20   # conservative: assume the smallest VMEM (v7x)


def _plan_tiles(n, l, budget, bytes_fn, payload_per_batch_fn):
    """Choose (bN, tL, padded_L) so that bytes_fn(bN, tL) stays under the VMEM budget."""
    if l <= 128:
        tl = l                                   # single full-width tile (block==dim ok)
    else:
        fitting = [c for c in _LANE_TILES if bytes_fn(1, c) <= budget] or [128]
        tl = fitting[-1]                         # smallest fitting as fallback
        for c in fitting:                        # biggest tile with <=12.5% padding waste
            if (_round_up(l, c) - l) * 8 <= l:
                tl = c
                break
        tl = min(tl, _round_up(l, 128))
    padded_l = _round_up(l, tl)

    bn = 1
    for d in range(1, n + 1):                    # divisors of N, ascending
        if n % d:
            continue
        if bytes_fn(d, tl) > budget:
            break
        bn = d
        if payload_per_batch_fn(tl) * d >= (1 << 20):   # >= ~1 MiB moved per grid step
            break
    return bn, tl, padded_l


# --------------------------- Pass 1: BN statistics ---------------------------

def _stats_kernel(x_ref, sum_ref, ssq_ref):
    # x_ref: (bN, C, tL).  sum_ref/ssq_ref: (1, C, 1), resident across the L grid axis
    # for the current batch group (accumulator pattern; L axis must stay "arbitrary").
    @pl.when(pl.program_id(1) == 0)
    def _init():
        sum_ref[...] = jnp.zeros_like(sum_ref)
        ssq_ref[...] = jnp.zeros_like(ssq_ref)

    x = x_ref[...].astype(jnp.float32)
    s_cl = jnp.sum(x, axis=0)                    # (C, tL): vreg adds over the leading dim
    q_cl = jnp.sum(x * x, axis=0)                # (C, tL)
    # One cross-lane (XLU) reduce per tile; fine while pass 1 stays HBM-bound.
    sum_ref[0] += jnp.sum(s_cl, axis=1, keepdims=True)
    ssq_ref[0] += jnp.sum(q_cl, axis=1, keepdims=True)


# ----------------- Pass 2: normalize + affine + ReLU (+ 1x1 conv) -----------------

def _bn_relu_kernel(x_ref, scale_ref, bias_ref, o_ref):
    # Fused BN+ReLU: 3 VPU ops / element, HBM-bound.
    h = jnp.maximum(x_ref[...] * scale_ref[...] + bias_ref[...], 0.0)
    o_ref[...] = h.astype(o_ref.dtype)


def _bn_relu_conv_kernel(x_ref, scale_ref, bias_ref, w_ref, o_ref, *,
                         bn, c_in, use_mxu, dot_dtype):
    # x_ref: (bN, Cin, tL), w_ref: (Cout, Cin) already in the dot dtype,
    # o_ref: (bN, Cout, tL).
    w = w_ref[...]
    for i in range(bn):                                    # static unroll over batch block
        h = jnp.maximum(x_ref[i] * scale_ref[...] + bias_ref[...], 0.0)   # (Cin, tL) f32
        if use_mxu:
            hd = h.astype(dot_dtype) if dot_dtype is not None else h
            o = jnp.dot(w, hd, preferred_element_type=jnp.float32)        # (Cout, tL)
        else:
            # Tiny contraction dim: a few VPU broadcast-FMAs; MXU stays idle.
            o = w[:, 0:1] * h[0:1, :]
            for ci in range(1, c_in):
                o = o + w[:, ci:ci + 1] * h[ci:ci + 1, :]
        o_ref[i] = o.astype(o_ref.dtype)


# ----------------------------------- wrapper -----------------------------------

def bottleneck_block(x_ncl, gamma, beta, conv_weight=None, *,
                     dot_dtype=jnp.bfloat16, out_dtype=None):
    """Forward pass of BottleneckBlock.

    x_ncl:       (N, C_in, L)              -- PyTorch NCL layout
    gamma, beta: (C_in,)                   -- BatchNorm1d affine params
    conv_weight: (C_out, C_in, 1) or None  -- None == disable_conv (in_planes==out_planes)
    dot_dtype:   MXU operand dtype for the 1x1 conv (default bf16; None keeps f32)
    out_dtype:   output dtype (default: x's dtype); bf16 halves the write stream
    """
    n, c_in, l = x_ncl.shape
    out_dtype = x_ncl.dtype if out_dtype is None else out_dtype
    x_item = jnp.dtype(x_ncl.dtype).itemsize
    out_item = jnp.dtype(out_dtype).itemsize

    use_conv = conv_weight is not None
    c_out = conv_weight.shape[0] if use_conv else c_in
    use_mxu = use_conv and c_in > _SMALL_CIN_FOR_VPU
    w_dtype = dot_dtype if (use_mxu and dot_dtype is not None) else jnp.float32
    w_item = jnp.dtype(w_dtype).itemsize

    vmem_cap = _vmem_capacity_bytes()
    budget = max(int(0.4 * vmem_cap), 16 << 20)

    def pass2_bytes(bn, tl):
        x_tile = bn * c_in * tl * x_item
        o_tile = bn * c_out * tl * out_item
        h_tile = c_in * tl * 4                               # f32 BN intermediate
        hd_tile = c_in * tl * w_item if use_mxu else 0       # dot-dtype copy of h
        params = 2 * c_in * 4 + (c_out * c_in * w_item if use_conv else 0)
        return 2 * (x_tile + o_tile) + h_tile + hd_tile + 2 * params + (2 << 20)

    def payload_per_batch(tl):
        return (c_in * x_item + c_out * out_item) * tl

    bn, tl, padded_l = _plan_tiles(n, l, budget, pass2_bytes, payload_per_batch)
    n_groups = n // bn
    grid = (n_groups, padded_l // tl)

    # Zero-pad L to a multiple of the lane tile (zeros add nothing to sum / sum-of-
    # squares; padded output lanes are sliced off at the end).
    x_p = x_ncl if padded_l == l else jnp.pad(
        x_ncl, ((0, 0), (0, 0), (0, padded_l - l)))

    x_spec = pl.BlockSpec((bn, c_in, tl), lambda b, j: (b, 0, j))
    chan_spec = pl.BlockSpec((c_in, 1), lambda b, j: (0, 0))
    acc_spec = pl.BlockSpec((1, c_in, 1), lambda b, j: (b, 0, 0))

    # ---- Pass 1: per-batch-group partial sums (race-free -> batch axis parallel). ----
    stats_vmem = 2 * (bn * c_in * tl * x_item) + 4 * c_in * 4 + (2 << 20)
    sums, ssq = pl.pallas_call(
        _stats_kernel,
        grid=grid,
        in_specs=[x_spec],
        out_specs=(acc_spec, acc_spec),
        out_shape=(jax.ShapeDtypeStruct((n_groups, c_in, 1), jnp.float32),
                   jax.ShapeDtypeStruct((n_groups, c_in, 1), jnp.float32)),
        compiler_params=pltpu.CompilerParams(
            dimension_semantics=("parallel", "arbitrary"),
            vmem_limit_bytes=int(min(max(stats_vmem, 16 << 20), 0.95 * vmem_cap))),
    )(x_p)

    # ---- Fold BN into per-channel scale/bias (tiny (C,) math in plain JAX). ----
    count = jnp.float32(n * l)                               # real L, not padded
    mean = jnp.sum(sums, axis=0) / count                     # (C, 1)
    var = jnp.maximum(jnp.sum(ssq, axis=0) / count - mean * mean, 0.0)   # biased var
    scale = gamma.astype(jnp.float32).reshape(c_in, 1) * jax.lax.rsqrt(var + EPS)
    bias = beta.astype(jnp.float32).reshape(c_in, 1) - mean * scale
    # TODO(synk): nn.BatchNorm1d training mode also updates running_mean/running_var
    # (module side effect, unbiased var); this pure forward kernel does not.

    # ---- Pass 2: normalize + affine + ReLU (+ optional 1x1 conv). ----
    if not use_conv:
        kernel = _bn_relu_kernel
        operands = (x_p, scale, bias)
        in_specs = [x_spec, chan_spec, chan_spec]
    else:
        w2d = conv_weight.reshape(c_out, c_in).astype(w_dtype)   # cast once, in wrapper
        kernel = functools.partial(_bn_relu_conv_kernel, bn=bn, c_in=c_in,
                                   use_mxu=use_mxu,
                                   dot_dtype=dot_dtype if use_mxu else None)
        operands = (x_p, scale, bias, w2d)
        in_specs = [x_spec, chan_spec, chan_spec,
                    pl.BlockSpec((c_out, c_in), lambda b, j: (0, 0))]

    out = pl.pallas_call(
        kernel,
        grid=grid,
        in_specs=in_specs,
        out_specs=pl.BlockSpec((bn, c_out, tl), lambda b, j: (b, 0, j)),
        out_shape=jax.ShapeDtypeStruct((n, c_out, padded_l), out_dtype),
        compiler_params=pltpu.CompilerParams(
            dimension_semantics=("parallel", "parallel"),
            vmem_limit_bytes=int(min(max(pass2_bytes(bn, tl), 16 << 20),
                                     0.95 * vmem_cap))),
    )(*operands)
    return out if padded_l == l else out[:, :, :l]


# --------------------------------- reference ---------------------------------

def _reference(x_ncl, gamma, beta, conv_weight=None):
    mean = jnp.mean(x_ncl, axis=(0, 2), keepdims=True)
    var = jnp.mean((x_ncl - mean) ** 2, axis=(0, 2), keepdims=True)
    xn = (x_ncl - mean) * jax.lax.rsqrt(var + EPS)
    h = jnp.maximum(xn * gamma[None, :, None] + beta[None, :, None], 0.0)
    if conv_weight is None:
        return h
    return jnp.einsum("oc,ncl->nol", conv_weight[:, :, 0], h)


if __name__ == "__main__":
    key = jax.random.PRNGKey(0)
    k_x, k_w, k_g, k_b, k_x2, k_w2, k_x3, k_w3 = jax.random.split(key, 8)

    fwd = jax.jit(bottleneck_block, static_argnames=("dot_dtype", "out_dtype"))

    # ---- Small test (toy module sizes): N=2, Cin=4, L=16, Cout=8 (VPU conv path). ----
    N, C_IN, L, C_OUT = 2, 4, 16, 8
    x = jax.random.normal(k_x, (N, C_IN, L), dtype=jnp.float32)
    gamma = 1.0 + 0.1 * jax.random.normal(k_g, (C_IN,), dtype=jnp.float32)
    beta = 0.1 * jax.random.normal(k_b, (C_IN,), dtype=jnp.float32)
    bound = C_IN ** -0.5
    conv_w = jax.random.uniform(k_w, (C_OUT, C_IN, 1), minval=-bound, maxval=bound,
                                dtype=jnp.float32)

    out_conv = jax.block_until_ready(fwd(x, gamma, beta, conv_w))
    ref_conv = _reference(x, gamma, beta, conv_w)
    assert out_conv.shape == (N, C_OUT, L)
    assert jnp.allclose(out_conv, ref_conv, atol=1e-4, rtol=1e-4), "conv path mismatch"

    # disable_conv path (in_planes == out_planes)
    out_id = jax.block_until_ready(fwd(x, gamma, beta, None))
    ref_id = _reference(x, gamma, beta, None)
    assert out_id.shape == (N, C_IN, L)
    assert jnp.allclose(out_id, ref_id, atol=1e-5, rtol=1e-5), "identity path mismatch"

    # ---- Medium test: L-tiled grid, batch blocking, lane-dense stores, MXU path. ----
    N2, C2_IN, C2_OUT, L2 = 2, 128, 128, 512
    x2 = jax.random.normal(k_x2, (N2, C2_IN, L2), dtype=jnp.float32)
    g2 = jnp.ones((C2_IN,), jnp.float32)
    b2 = jnp.zeros((C2_IN,), jnp.float32)
    bound2 = C2_IN ** -0.5
    w2 = jax.random.uniform(k_w2, (C2_OUT, C2_IN, 1), minval=-bound2, maxval=bound2,
                            dtype=jnp.float32)

    out2_f32 = jax.block_until_ready(fwd(x2, g2, b2, w2, dot_dtype=None))
    ref2 = _reference(x2, g2, b2, w2)
    assert out2_f32.shape == (N2, C2_OUT, L2)
    assert jnp.allclose(out2_f32, ref2, atol=5e-3, rtol=5e-3), "MXU f32 path mismatch"

    # Default bf16 matmul operands (f32 accumulate): looser tolerance.
    out2_bf16 = jax.block_until_ready(fwd(x2, g2, b2, w2))
    assert jnp.allclose(out2_bf16, ref2, atol=5e-2, rtol=5e-2), "MXU bf16 path mismatch"

    # ---- Ragged-L test: exercises zero-padding + multi-tile grid + stats masking. ----
    N3, C3_IN, C3_OUT, L3 = 2, 8, 16, 200
    x3 = jax.random.normal(k_x3, (N3, C3_IN, L3), dtype=jnp.float32)
    g3 = 1.0 + 0.05 * jax.random.normal(k_g, (C3_IN,), dtype=jnp.float32)
    b3 = 0.05 * jax.random.normal(k_b, (C3_IN,), dtype=jnp.float32)
    bound3 = C3_IN ** -0.5
    w3 = jax.random.uniform(k_w3, (C3_OUT, C3_IN, 1), minval=-bound3, maxval=bound3,
                            dtype=jnp.float32)

    out3 = jax.block_until_ready(fwd(x3, g3, b3, w3, dot_dtype=None))
    ref3 = _reference(x3, g3, b3, w3)
    assert out3.shape == (N3, C3_OUT, L3)
    assert jnp.allclose(out3, ref3, atol=1e-4, rtol=1e-4), "ragged-L path mismatch"

    print("KERNEL_OK")
</pallas_src>

<mosaic_0001>
module attributes {stable_mosaic.version = 11 : i64} {
  func.func @_stats_kernel(%arg0: i32, %arg1: i32, %arg2: memref<2x4x16xf32, #tpu.memory_space<vmem>>, %arg3: memref<1x4x1xf32, #tpu.memory_space<vmem>>, %arg4: memref<1x4x1xf32, #tpu.memory_space<vmem>>) attributes {dimension_semantics = [#tpu.dimension_semantics<parallel>, #tpu.dimension_semantics<arbitrary>], iteration_bounds = array<i64: 1, 1>, scalar_prefetch = 0 : i64, scratch_operands = 0 : i64, tpu.core_type = #tpu.core_type<tc>, window_params = [{transform_indices = @transform_0, window_bounds = array<i64: 2, 4, 16>}, {transform_indices = @transform_1, window_bounds = array<i64: 1, 4, 1>}, {transform_indices = @transform_2, window_bounds = array<i64: 1, 4, 1>}]} {
    %c0_i32 = arith.constant 0 : i32
    %0 = arith.cmpi eq, %arg1, %c0_i32 : i32
    %1 = arith.extui %0 : i1 to i32
    %c0_i32_0 = arith.constant 0 : i32
    %2 = arith.cmpi ne, %1, %c0_i32_0 : i32
    scf.if %2 {
      %cst_18 = arith.constant 0.000000e+00 : f32
      %23 = vector.broadcast %cst_18 : f32 to vector<1x4x1xf32>
      %c0_19 = arith.constant 0 : index
      %c0_20 = arith.constant 0 : index
      %c0_21 = arith.constant 0 : index
      %24 = vector.load %arg3[%c0_19, %c0_20, %c0_21] : memref<1x4x1xf32, #tpu.memory_space<vmem>>, vector<1x4x1xf32>
      tpu.vector_store %arg3[%c0_19, %c0_20, %c0_21], %23 {strides = array<i32>} : memref<1x4x1xf32, #tpu.memory_space<vmem>>, vector<1x4x1xf32>,
      %cst_22 = arith.constant 0.000000e+00 : f32
      %25 = vector.broadcast %cst_22 : f32 to vector<1x4x1xf32>
      %c0_23 = arith.constant 0 : index
      %c0_24 = arith.constant 0 : index
      %c0_25 = arith.constant 0 : index
      %26 = vector.load %arg4[%c0_23, %c0_24, %c0_25] : memref<1x4x1xf32, #tpu.memory_space<vmem>>, vector<1x4x1xf32>
      tpu.vector_store %arg4[%c0_23, %c0_24, %c0_25], %25 {strides = array<i32>} : memref<1x4x1xf32, #tpu.memory_space<vmem>>, vector<1x4x1xf32>,
    } else {
    }
    %c0 = arith.constant 0 : index
    %c0_1 = arith.constant 0 : index
    %c0_2 = arith.constant 0 : index
    %3 = vector.load %arg2[%c0, %c0_1, %c0_2] : memref<2x4x16xf32, #tpu.memory_space<vmem>>, vector<2x4x16xf32>
    %cst = arith.constant dense<0.000000e+00> : vector<4x16xf32>
    %4 = vector.multi_reduction <add>, %3, %cst [0] : vector<2x4x16xf32> to vector<4x16xf32>
    %5 = arith.mulf %3, %3 : vector<2x4x16xf32>
    %cst_3 = arith.constant dense<0.000000e+00> : vector<4x16xf32>
    %6 = vector.multi_reduction <add>, %5, %cst_3 [0] : vector<2x4x16xf32> to vector<4x16xf32>
    %c0_4 = arith.constant 0 : index
    %c0_5 = arith.constant 0 : index
    %c0_6 = arith.constant 0 : index
    %7 = vector.load %arg3[%c0_4, %c0_5, %c0_6] : memref<1x4x1xf32, #tpu.memory_space<vmem>>, vector<1x4x1xf32>
    %8 = vector.shape_cast %7 : vector<1x4x1xf32> to vector<4x1xf32>
    %cst_7 = arith.constant dense<0.000000e+00> : vector<4xf32>
    %9 = vector.multi_reduction <add>, %4, %cst_7 [1] : vector<4x16xf32> to vector<4xf32>
    %10 = vector.shape_cast %9 : vector<4xf32> to vector<4x1xf32>
    %11 = arith.addf %8, %10 : vector<4x1xf32>
    %c0_8 = arith.constant 0 : index
    %c0_9 = arith.constant 0 : index
    %c0_10 = arith.constant 0 : index
    %12 = vector.load %arg3[%c0_8, %c0_9, %c0_10] : memref<1x4x1xf32, #tpu.memory_space<vmem>>, vector<1x4x1xf32>
    %13 = vector.shape_cast %12 : vector<1x4x1xf32> to vector<4x1xf32>
    %14 = vector.shape_cast %11 : vector<4x1xf32> to vector<1x4x1xf32>
    tpu.vector_store %arg3[%c0_8, %c0_9, %c0_10], %14 {strides = array<i32>} : memref<1x4x1xf32, #tpu.memory_space<vmem>>, vector<1x4x1xf32>,
    %c0_11 = arith.constant 0 : index
    %c0_12 = arith.constant 0 : index
    %c0_13 = arith.constant 0 : index
    %15 = vector.load %arg4[%c0_11, %c0_12, %c0_13] : memref<1x4x1xf32, #tpu.memory_space<vmem>>, vector<1x4x1xf32>
    %16 = vector.shape_cast %15 : vector<1x4x1xf32> to vector<4x1xf32>
    %cst_14 = arith.constant dense<0.000000e+00> : vector<4xf32>
    %17 = vector.multi_reduction <add>, %6, %cst_14 [1] : vector<4x16xf32> to vector<4xf32>
    %18 = vector.shape_cast %17 : vector<4xf32> to vector<4x1xf32>
    %19 = arith.addf %16, %18 : vector<4x1xf32>
    %c0_15 = arith.constant 0 : index
    %c0_16 = arith.constant 0 : index
    %c0_17 = arith.constant 0 : index
    %20 = vector.load %arg4[%c0_15, %c0_16, %c0_17] : memref<1x4x1xf32, #tpu.memory_space<vmem>>, vector<1x4x1xf32>
    %21 = vector.shape_cast %20 : vector<1x4x1xf32> to vector<4x1xf32>
    %22 = vector.shape_cast %19 : vector<4x1xf32> to vector<1x4x1xf32>
    tpu.vector_store %arg4[%c0_15, %c0_16, %c0_17], %22 {strides = array<i32>} : memref<1x4x1xf32, #tpu.memory_space<vmem>>, vector<1x4x1xf32>,
    return
  }
  func.func @transform_0(%arg0: i32, %arg1: i32) -> (i32, i32, i32) {
    %c0_i32 = arith.constant 0 : i32
    %c0_i32_0 = arith.constant 0 : i32
    return %arg0, %c0_i32, %arg1 : i32, i32, i32
  }
  func.func @transform_1(%arg0: i32, %arg1: i32) -> (i32, i32, i32) {
    %c0_i32 = arith.constant 0 : i32
    %c0_i32_0 = arith.constant 0 : i32
    %c0_i32_1 = arith.constant 0 : i32
    return %arg0, %c0_i32, %c0_i32_0 : i32, i32, i32
  }
  func.func @transform_2(%arg0: i32, %arg1: i32) -> (i32, i32, i32) {
    %c0_i32 = arith.constant 0 : i32
    %c0_i32_0 = arith.constant 0 : i32
    %c0_i32_1 = arith.constant 0 : i32
    return %arg0, %c0_i32, %c0_i32_0 : i32, i32, i32
  }
}

module attributes {stable_mosaic.version = 11 : i64} {
  func.func @_bn_relu_conv_kernel(%arg0: i32, %arg1: i32, %arg2: memref<2x4x16xf32, #tpu.memory_space<vmem>>, %arg3: memref<4x1xf32, #tpu.memory_space<vmem>>, %arg4: memref<4x1xf32, #tpu.memory_space<vmem>>, %arg5: memref<8x4xf32, #tpu.memory_space<vmem>>, %arg6: memref<2x8x16xf32, #tpu.memory_space<vmem>>) attributes {dimension_semantics = [#tpu.dimension_semantics<parallel>, #tpu.dimension_semantics<parallel>], iteration_bounds = array<i64: 1, 1>, scalar_prefetch = 0 : i64, scratch_operands = 0 : i64, tpu.core_type = #tpu.core_type<tc>, window_params = [{transform_indices = @transform_0, window_bounds = array<i64: 2, 4, 16>}, {pipeline_mode = #tpu.pipeline_mode<synchronous>, transform_indices = @transform_1, window_bounds = array<i64: 4, 1>}, {pipeline_mode = #tpu.pipeline_mode<synchronous>, transform_indices = @transform_2, window_bounds = array<i64: 4, 1>}, {pipeline_mode = #tpu.pipeline_mode<synchronous>, transform_indices = @transform_3, window_bounds = array<i64: 8, 4>}, {transform_indices = @transform_4, window_bounds = array<i64: 2, 8, 16>}]} {
    %c0 = arith.constant 0 : index
    %c0_0 = arith.constant 0 : index
    %0 = vector.load %arg5[%c0, %c0_0] : memref<8x4xf32, #tpu.memory_space<vmem>>, vector<8x4xf32>
    %c0_1 = arith.constant 0 : index
    %c0_2 = arith.constant 0 : index
    %c0_3 = arith.constant 0 : index
    %1 = vector.load %arg2[%c0_1, %c0_2, %c0_3] : memref<2x4x16xf32, #tpu.memory_space<vmem>>, vector<1x4x16xf32>
    %2 = vector.shape_cast %1 : vector<1x4x16xf32> to vector<4x16xf32>
    %c0_4 = arith.constant 0 : index
    %c0_5 = arith.constant 0 : index
    %3 = vector.load %arg3[%c0_4, %c0_5] : memref<4x1xf32, #tpu.memory_space<vmem>>, vector<4x1xf32>
    %4 = vector.broadcast %3 : vector<4x1xf32> to vector<4x16xf32>
    %5 = arith.mulf %2, %4 : vector<4x16xf32>
    %c0_6 = arith.constant 0 : index
    %c0_7 = arith.constant 0 : index
    %6 = vector.load %arg4[%c0_6, %c0_7] : memref<4x1xf32, #tpu.memory_space<vmem>>, vector<4x1xf32>
    %7 = vector.broadcast %6 : vector<4x1xf32> to vector<4x16xf32>
    %8 = arith.addf %5, %7 : vector<4x16xf32>
    %cst = arith.constant 0.000000e+00 : f32
    %9 = vector.broadcast %cst : f32 to vector<4x16xf32>
    %10 = arith.maximumf %8, %9 : vector<4x16xf32>
    %11 = vector.extract_strided_slice %0 {offsets = [0, 0], sizes = [8, 1], strides = [1, 1]} : vector<8x4xf32> to vector<8x1xf32>
    %12 = vector.extract_strided_slice %10 {offsets = [0, 0], sizes = [1, 16], strides = [1, 1]} : vector<4x16xf32> to vector<1x16xf32>
    %13 = vector.broadcast %11 : vector<8x1xf32> to vector<8x16xf32>
    %14 = vector.broadcast %12 : vector<1x16xf32> to vector<8x16xf32>
    %15 = arith.mulf %13, %14 : vector<8x16xf32>
    %16 = vector.extract_strided_slice %0 {offsets = [0, 1], sizes = [8, 1], strides = [1, 1]} : vector<8x4xf32> to vector<8x1xf32>
    %17 = vector.extract_strided_slice %10 {offsets = [1, 0], sizes = [1, 16], strides = [1, 1]} : vector<4x16xf32> to vector<1x16xf32>
    %18 = vector.broadcast %16 : vector<8x1xf32> to vector<8x16xf32>
    %19 = vector.broadcast %17 : vector<1x16xf32> to vector<8x16xf32>
    %20 = arith.mulf %18, %19 : vector<8x16xf32>
    %21 = arith.addf %15, %20 : vector<8x16xf32>
    %22 = vector.extract_strided_slice %0 {offsets = [0, 2], sizes = [8, 1], strides = [1, 1]} : vector<8x4xf32> to vector<8x1xf32>
    %23 = vector.extract_strided_slice %10 {offsets = [2, 0], sizes = [1, 16], strides = [1, 1]} : vector<4x16xf32> to vector<1x16xf32>
    %24 = vector.broadcast %22 : vector<8x1xf32> to vector<8x16xf32>
    %25 = vector.broadcast %23 : vector<1x16xf32> to vector<8x16xf32>
    %26 = arith.mulf %24, %25 : vector<8x16xf32>
    %27 = arith.addf %21, %26 : vector<8x16xf32>
    %28 = vector.extract_strided_slice %0 {offsets = [0, 3], sizes = [8, 1], strides = [1, 1]} : vector<8x4xf32> to vector<8x1xf32>
    %29 = vector.extract_strided_slice %10 {offsets = [3, 0], sizes = [1, 16], strides = [1, 1]} : vector<4x16xf32> to vector<1x16xf32>
    %30 = vector.broadcast %28 : vector<8x1xf32> to vector<8x16xf32>
    %31 = vector.broadcast %29 : vector<1x16xf32> to vector<8x16xf32>
    %32 = arith.mulf %30, %31 : vector<8x16xf32>
    %33 = arith.addf %27, %32 : vector<8x16xf32>
    %c0_8 = arith.constant 0 : index
    %c0_9 = arith.constant 0 : index
    %c0_10 = arith.constant 0 : index
    %34 = vector.load %arg6[%c0_8, %c0_9, %c0_10] : memref<2x8x16xf32, #tpu.memory_space<vmem>>, vector<1x8x16xf32>
    %35 = vector.shape_cast %34 : vector<1x8x16xf32> to vector<8x16xf32>
    %36 = vector.shape_cast %33 : vector<8x16xf32> to vector<1x8x16xf32>
    tpu.vector_store %arg6[%c0_8, %c0_9, %c0_10], %36 {strides = array<i32>} : memref<2x8x16xf32, #tpu.memory_space<vmem>>, vector<1x8x16xf32>,
    %c1 = arith.constant 1 : index
    %c0_11 = arith.constant 0 : index
    %c0_12 = arith.constant 0 : index
    %37 = vector.load %arg2[%c1, %c0_11, %c0_12] : memref<2x4x16xf32, #tpu.memory_space<vmem>>, vector<1x4x16xf32>
    %38 = vector.shape_cast %37 : vector<1x4x16xf32> to vector<4x16xf32>
    %c0_13 = arith.constant 0 : index
    %c0_14 = arith.constant 0 : index
    %39 = vector.load %arg3[%c0_13, %c0_14] : memref<4x1xf32, #tpu.memory_space<vmem>>, vector<4x1xf32>
    %40 = vector.broadcast %39 : vector<4x1xf32> to vector<4x16xf32>
    %41 = arith.mulf %38, %40 : vector<4x16xf32>
    %c0_15 = arith.constant 0 : index
    %c0_16 = arith.constant 0 : index
    %42 = vector.load %arg4[%c0_15, %c0_16] : memref<4x1xf32, #tpu.memory_space<vmem>>, vector<4x1xf32>
    %43 = vector.broadcast %42 : vector<4x1xf32> to vector<4x16xf32>
    %44 = arith.addf %41, %43 : vector<4x16xf32>
    %cst_17 = arith.constant 0.000000e+00 : f32
    %45 = vector.broadcast %cst_17 : f32 to vector<4x16xf32>
    %46 = arith.maximumf %44, %45 : vector<4x16xf32>
    %47 = vector.extract_strided_slice %0 {offsets = [0, 0], sizes = [8, 1], strides = [1, 1]} : vector<8x4xf32> to vector<8x1xf32>
    %48 = vector.extract_strided_slice %46 {offsets = [0, 0], sizes = [1, 16], strides = [1, 1]} : vector<4x16xf32> to vector<1x16xf32>
    %49 = vector.broadcast %47 : vector<8x1xf32> to vector<8x16xf32>
    %50 = vector.broadcast %48 : vector<1x16xf32> to vector<8x16xf32>
    %51 = arith.mulf %49, %50 : vector<8x16xf32>
    %52 = vector.extract_strided_slice %0 {offsets = [0, 1], sizes = [8, 1], strides = [1, 1]} : vector<8x4xf32> to vector<8x1xf32>
    %53 = vector.extract_strided_slice %46 {offsets = [1, 0], sizes = [1, 16], strides = [1, 1]} : vector<4x16xf32> to vector<1x16xf32>
    %54 = vector.broadcast %52 : vector<8x1xf32> to vector<8x16xf32>
    %55 = vector.broadcast %53 : vector<1x16xf32> to vector<8x16xf32>
    %56 = arith.mulf %54, %55 : vector<8x16xf32>
    %57 = arith.addf %51, %56 : vector<8x16xf32>
    %58 = vector.extract_strided_slice %0 {offsets = [0, 2], sizes = [8, 1], strides = [1, 1]} : vector<8x4xf32> to vector<8x1xf32>
    %59 = vector.extract_strided_slice %46 {offsets = [2, 0], sizes = [1, 16], strides = [1, 1]} : vector<4x16xf32> to vector<1x16xf32>
    %60 = vector.broadcast %58 : vector<8x1xf32> to vector<8x16xf32>
    %61 = vector.broadcast %59 : vector<1x16xf32> to vector<8x16xf32>
    %62 = arith.mulf %60, %61 : vector<8x16xf32>
    %63 = arith.addf %57, %62 : vector<8x16xf32>
    %64 = vector.extract_strided_slice %0 {offsets = [0, 3], sizes = [8, 1], strides = [1, 1]} : vector<8x4xf32> to vector<8x1xf32>
    %65 = vector.extract_strided_slice %46 {offsets = [3, 0], sizes = [1, 16], strides = [1, 1]} : vector<4x16xf32> to vector<1x16xf32>
    %66 = vector.broadcast %64 : vector<8x1xf32> to vector<8x16xf32>
    %67 = vector.broadcast %65 : vector<1x16xf32> to vector<8x16xf32>
    %68 = arith.mulf %66, %67 : vector<8x16xf32>
    %69 = arith.addf %63, %68 : vector<8x16xf32>
    %c1_18 = arith.constant 1 : index
    %c0_19 = arith.constant 0 : index
    %c0_20 = arith.constant 0 : index
    %70 = vector.load %arg6[%c1_18, %c0_19, %c0_20] : memref<2x8x16xf32, #tpu.memory_space<vmem>>, vector<1x8x16xf32>
    %71 = vector.shape_cast %70 : vector<1x8x16xf32> to vector<8x16xf32>
    %72 = vector.shape_cast %69 : vector<8x16xf32> to vector<1x8x16xf32>
    tpu.vector_store %arg6[%c1_18, %c0_19, %c0_20], %72 {strides = array<i32>} : memref<2x8x16xf32, #tpu.memory_space<vmem>>, vector<1x8x16xf32>,
    return
  }
  func.func @transform_0(%arg0: i32, %arg1: i32) -> (i32, i32, i32) {
    %c0_i32 = arith.constant 0 : i32
    %c0_i32_0 = arith.constant 0 : i32
    return %arg0, %c0_i32, %arg1 : i32, i32, i32
  }
  func.func @transform_1(%arg0: i32, %arg1: i32) -> (i32, i32) {
    %c0_i32 = arith.constant 0 : i32
    %c0_i32_0 = arith.constant 0 : i32
    %c0_i32_1 = arith.constant 0 : i32
    return %c0_i32, %c0_i32_0 : i32, i32
  }
  func.func @transform_2(%arg0: i32, %arg1: i32) -> (i32, i32) {
    %c0_i32 = arith.constant 0 : i32
    %c0_i32_0 = arith.constant 0 : i32
    %c0_i32_1 = arith.constant 0 : i32
    return %c0_i32, %c0_i32_0 : i32, i32
  }
  func.func @transform_3(%arg0: i32, %arg1: i32) -> (i32, i32) {
    %c0_i32 = arith.constant 0 : i32
    %c0_i32_0 = arith.constant 0 : i32
    %c0_i32_1 = arith.constant 0 : i32
    return %c0_i32, %c0_i32_0 : i32, i32
  }
  func.func @transform_4(%arg0: i32, %arg1: i32) -> (i32, i32, i32) {
    %c0_i32 = arith.constant 0 : i32
    %c0_i32_0 = arith.constant 0 : i32
    return %arg0, %c0_i32, %arg1 : i32, i32, i32
  }
}

</mosaic_0001>

<llo_original>
// kernel: bottleneck_block.2
$region0: #{bottleneck_block.2}
  #allocation0 [shape = 'u32[]', space=smem, size = 0x4, offset = 0x4, fixed_abs, tag = 'smem constant byte address 0x4 - core index']
  #allocation1 [shape = 'u32[144,128]{1,0:T(1,128)}', space=vmem, size = 0x12000, scoped, tag = 'internal scratch']
  %s0 = inlined_call_operand.vmem [shape: f32[2,4,16], index: 0, kind: input, shape index: {}]
  %s1 = inlined_call_operand.vmem [shape: f32[1,4,1], index: 1, kind: output, shape index: {0}]
  %s2 = inlined_call_operand.vmem [shape: f32[1,4,1], index: 2, kind: output, shape index: {1}]
  %3 = xla_tuple %s1, %s2
  %s4 = sld [smem:[#allocation0]]
  $region26: #{bottleneck_block.2} parent=0
    _
  %s6 = ssub.s32 1, %s4
  %s7 = scalar_select 0, %s6, %s4
  // Predicated region
  $region2: #{bottleneck_block.2} parent=0 // pred_check
    _
  $region3: #{bottleneck_block.2} parent=0 // pred_check_branch
    %9 = sbr.rel (0) target = $region5
  $region4: #{bottleneck_block.2} parent=0 // pred_region
    _
  $region5: #{bottleneck_block.2} parent=0 // pred_fallthru
    _
  %p10 = scmp.eq.s32.totalorder 0, 0
  // Predicated region
  $region6: #{bottleneck_block.2} parent=0 // pred_check
    %p11 = pneg %p10
  $region7: #{bottleneck_block.2} parent=0 // pred_check_branch
    %13 = sbr.rel (%p11) target = $region9
  $region8: #{bottleneck_block.2} parent=0 // pred_region
    %vm14 = vcmask 3072
    %15 = vst.msk [vmem:[%s1] sm:$0xf] %vm14, 0.0
    %16 = vst.msk [vmem:[%s2] sm:$0xf] %vm14, 0.0
  $region9: #{bottleneck_block.2} parent=0 // pred_fallthru
    _
  %v17 = vld [vmem:[%s0] sm:$0xf]
  %v18 = vld [vmem:[%s0 + $0x4] sm:$0xf]
  %vm19 = vcmask 125952
  %v20 = vsel %vm19, %v17, 0.0
  %v21 = vsel %vm19, %v18, 0.0
  %v22 = vadd.f32 %v20, %v21
  %v23 = vmul.f32 %v17, %v17
  %v24 = vmul.f32 %v18, %v18
  %v25 = vsel %vm19, %v23, 0.0
  %v26 = vsel %vm19, %v24, 0.0
  %v27 = vadd.f32 %v25, %v26
  %v28 = vld [vmem:[%s1] sm:$0xf]
  %v29 = vsel %vm19, %v22, 0.0
  %30 = vadd.xlane.f32.xlu0 %v29
  %v31 = vpop.xlane.xlu0 %30
  %v32 = vadd.f32 %v28, %v31
  %vm33 = vcmask 3072
  %34 = vst.msk [vmem:[%s1] sm:$0xf] %vm33, %v32
  %v35 = vld [vmem:[%s2] sm:$0xf]
  %v36 = vsel %vm19, %v27, 0.0
  %37 = vadd.xlane.f32.xlu0 %v36
  %v38 = vpop.xlane.xlu0 %37
  %v39 = vadd.f32 %v35, %v38
  %40 = vst.msk [vmem:[%s2] sm:$0xf] %vm33, %v39
  // Predicated region
  $region10: #{bottleneck_block.2} parent=0 // pred_check
    _
  $region11: #{bottleneck_block.2} parent=0 // pred_check_branch
    %42 = sbr.rel (0) target = $region13
  $region12: #{bottleneck_block.2} parent=0 // pred_region
    _
  $region13: #{bottleneck_block.2} parent=0 // pred_fallthru
    _
  // Predicated region
  $region14: #{bottleneck_block.2} parent=0 // pred_check
    _
  $region15: #{bottleneck_block.2} parent=0 // pred_check_branch
    %44 = sbr.rel (0) target = $region17
  $region16: #{bottleneck_block.2} parent=0 // pred_region
    _
  $region17: #{bottleneck_block.2} parent=0 // pred_fallthru
    _
  // Predicated region
  $region18: #{bottleneck_block.2} parent=0 // pred_check
    _
  $region19: #{bottleneck_block.2} parent=0 // pred_check_branch
    %46 = sbr.rel (0) target = $region21
  $region20: #{bottleneck_block.2} parent=0 // pred_region
    _
  $region21: #{bottleneck_block.2} parent=0 // pred_fallthru
    _
  // Predicated region
  $region22: #{bottleneck_block.2} parent=0 // pred_check
    _
  $region23: #{bottleneck_block.2} parent=0 // pred_check_branch
    %48 = sbr.rel (0) target = $region25
  $region24: #{bottleneck_block.2} parent=0 // pred_region
    _
  $region25: #{bottleneck_block.2} parent=0 // pred_fallthru
    _

// kernel: bottleneck_block.3
$region0: #{bottleneck_block.3}
  #allocation0 [shape = 'u32[]', space=smem, size = 0x4, offset = 0x4, fixed_abs, tag = 'smem constant byte address 0x4 - core index']
  #allocation1 [shape = 'u32[144,128]{1,0:T(1,128)}', space=vmem, size = 0x12000, scoped, tag = 'internal scratch']
  %s0 = inlined_call_operand.vmem [shape: f32[2,4,16], index: 0, kind: input, shape index: {}]
  %s1 = inlined_call_operand.vmem [shape: f32[4,1], index: 1, kind: input, shape index: {}]
  %s2 = inlined_call_operand.vmem [shape: f32[4,1], index: 2, kind: input, shape index: {}]
  %s3 = inlined_call_operand.vmem [shape: f32[8,4], index: 3, kind: input, shape index: {}]
  %s4 = inlined_call_operand.hbm [shape: f32[2,8,16], index: 4, kind: output, shape index: {}]
  %s5 = sld [smem:[#allocation0]]
  $region26: #{bottleneck_block.3} parent=0
    _
  %s7 = ssub.s32 1, %s5
  %s8 = scalar_select 0, %s7, %s5
  $region1: #{bottleneck_block.3} parent=0
    #allocation2 [shape = 'u8[8192]{0}', space=vmem, size = 0x2000, scoped, tag = 'output window, operand 0, single buffered']
    #allocation3 [shape = 's32[1]{0}', space=sflag, size = 0x4, scoped, tag = 'scoped memory for bottleneck_block.3']
    %9 = vsyncpa [#allocation3], 0
    // Predicated region
    $region2: #{bottleneck_block.3} parent=1 // pred_check
      _
    $region3: #{bottleneck_block.3} parent=1 // pred_check_branch
      %11 = sbr.rel (0) target = $region5
    $region4: #{bottleneck_block.3} parent=1 // pred_region
      _
    $region5: #{bottleneck_block.3} parent=1 // pred_fallthru
      _
    // Predicated region
    $region6: #{bottleneck_block.3} parent=1 // pred_check
      _
    $region7: #{bottleneck_block.3} parent=1 // pred_check_branch
      %13 = sbr.rel (0) target = $region9
    $region8: #{bottleneck_block.3} parent=1 // pred_region
      _
    $region9: #{bottleneck_block.3} parent=1 // pred_fallthru
      _
    // Predicated region
    $region10: #{bottleneck_block.3} parent=1 // pred_check
      _
    $region11: #{bottleneck_block.3} parent=1 // pred_check_branch
      %15 = sbr.rel (0) target = $region13
    $region12: #{bottleneck_block.3} parent=1 // pred_region
      _
    $region13: #{bottleneck_block.3} parent=1 // pred_fallthru
      _
    // Predicated region
    $region14: #{bottleneck_block.3} parent=1 // pred_check
      _
    $region15: #{bottleneck_block.3} parent=1 // pred_check_branch
      %17 = sbr.rel (0) target = $region17
    $region16: #{bottleneck_block.3} parent=1 // pred_region
      _
    $region17: #{bottleneck_block.3} parent=1 // pred_fallthru
      _
    %v18 = vld [vmem:[%s3] sm:$0xff]
    %v19 = vld [vmem:[%s0] sm:$0xf]
    %v20 = vld [vmem:[%s1] sm:$0xf]
    %22 = vset.pattern.permute.xlu0 0
    %23 = vperm.xlu0 %22, %v20
    %v24 = vpop.permute.xlu0 %23
    %v26 = vmul.f32 %v19, %v24
    %v27 = vld [vmem:[%s2] sm:$0xf]
    %29 = vset.pattern.permute.xlu0 0
    %30 = vperm.xlu0 %29, %v27
    %v31 = vpop.permute.xlu0 %30
    %v33 = vadd.f32 %v26, %v31
    %v34 = vmax.f32 %v33, 0.0
    %36 = vset.pattern.permute.xlu0 0
    %37 = vperm.xlu0 %36, %v18
    %v38 = vpop.permute.xlu0 %37
    %v40 = vlaneseq
    %v41 = vshrl.u32 %v40, 7
    %v42 = vsub.s32 0, %v41
    %v43 = vrot.slane %v34, %v42
    %v44 = vmul.f32 %v38, %v43
    %45 = vset.pattern.permute.xlu0 1
    %46 = vperm.xlu0 %45, %v18
    %v47 = vpop.permute.xlu0 %46
    %v49 = vlaneseq
    %v50 = vshrl.u32 %v49, 7
    %v51 = vsub.s32 1, %v50
    %v52 = vrot.slane %v34, %v51
    %v53 = vmul.f32 %v47, %v52
    %v54 = vadd.f32 %v44, %v53
    %55 = vset.pattern.permute.xlu0 2
    %56 = vperm.xlu0 %55, %v18
    %v57 = vpop.permute.xlu0 %56
    %v59 = vlaneseq
    %v60 = vshrl.u32 %v59, 7
    %v61 = vsub.s32 2, %v60
    %v62 = vrot.slane %v34, %v61
    %v63 = vmul.f32 %v57, %v62
    %v64 = vadd.f32 %v54, %v63
    %65 = vset.pattern.permute.xlu0 3
    %66 = vperm.xlu0 %65, %v18
    %v67 = vpop.permute.xlu0 %66
    %v69 = vlaneseq
    %v70 = vshrl.u32 %v69, 7
    %v71 = vsub.s32 3, %v70
    %v72 = vrot.slane %v34, %v71
    %v73 = vmul.f32 %v67, %v72
    %v74 = vadd.f32 %v64, %v73
    %vm75 = vcmask 130048
    %76 = vst.msk [vmem:[#allocation2] sm:$0xff] %vm75, %v74
    %s77 = scalar_lea.vmem %s0, 4
    %v78 = vld [vmem:[%s77] sm:$0xf]
    %v79 = vld [vmem:[%s1] sm:$0xf]
    %81 = vset.pattern.permute.xlu0 0
    %82 = vperm.xlu0 %81, %v79
    %v83 = vpop.permute.xlu0 %82
    %v85 = vmul.f32 %v78, %v83
    %v86 = vld [vmem:[%s2] sm:$0xf]
    %88 = vset.pattern.permute.xlu0 0
    %89 = vperm.xlu0 %88, %v86
    %v90 = vpop.permute.xlu0 %89
    %v92 = vadd.f32 %v85, %v90
    %v93 = vmax.f32 %v92, 0.0
    %v94 = vlaneseq
    %v95 = vshrl.u32 %v94, 7
    %v96 = vsub.s32 0, %v95
    %v97 = vrot.slane %v93, %v96
    %v98 = vmul.f32 %v38, %v97
    %v99 = vlaneseq
    %v100 = vshrl.u32 %v99, 7
    %v101 = vsub.s32 1, %v100
    %v102 = vrot.slane %v93, %v101
    %v103 = vmul.f32 %v47, %v102
    %v104 = vadd.f32 %v98, %v103
    %v105 = vlaneseq
    %v106 = vshrl.u32 %v105, 7
    %v107 = vsub.s32 2, %v106
    %v108 = vrot.slane %v93, %v107
    %v109 = vmul.f32 %v57, %v108
    %v110 = vadd.f32 %v104, %v109
    %v111 = vlaneseq
    %v112 = vshrl.u32 %v111, 7
    %v113 = vsub.s32 3, %v112
    %v114 = vrot.slane %v93, %v113
    %v115 = vmul.f32 %v67, %v114
    %v116 = vadd.f32 %v110, %v115
    %s117 = scalar_lea.vmem [#allocation2], 8
    %118 = vst.msk [vmem:[%s117] sm:$0xff] %vm75, %v116
    // Predicated region
    $region18: #{bottleneck_block.3} parent=1 // pred_check
      _
    $region19: #{bottleneck_block.3} parent=1 // pred_check_branch
      %120 = sbr.rel (0) target = $region21
    $region20: #{bottleneck_block.3} parent=1 // pred_region
      %s122 = ssub.s32 256, 256
      %123 = vsyncadd [#allocation3], %s122
      %s124 = sshll.u32 [#allocation2], 4
      %s125 = int_to_ptr.vmem [resolvable:$true] %s124
      %130 = dma.vmem_to_hbm [thread:$0]  %s125, 256, %s4, [#allocation3], 128, 128, 8
    $region21: #{bottleneck_block.3} parent=1 // pred_fallthru
      _
    // Predicated region
    $region22: #{bottleneck_block.3} parent=1 // pred_check
      _
    $region23: #{bottleneck_block.3} parent=1 // pred_check_branch
      %132 = sbr.rel (0) target = $region25
    $region24: #{bottleneck_block.3} parent=1 // pred_region
      %133 = dma.done [#allocation3], 256
    $region25: #{bottleneck_block.3} parent=1 // pred_fallthru
      _
    %134 = vsyncpa [#allocation3], 1

</llo_original>
